<compile_context>
chip_gen: v5e
topology: v5e:2x2
jax: 0.10.0
libtpu: 0.0.40
codegen_flags: <defaults>
</compile_context>

<pallas_src>
import functools

import jax
import jax.numpy as jnp
from jax.experimental import pallas as pl
from jax.experimental.pallas import tpu as pltpu


def _l2norm_kernel(w_ref, x_ref, o_ref, *, eps):
    # x_ref / o_ref: (C, T) spatial tile of one batch element (batch squeezed).
    # w_ref:         (C, 1) per-channel scale, resident in VMEM across steps.
    xf = x_ref[...].astype(jnp.float32)                        # (C, T)
    wf = w_ref[...].astype(jnp.float32)                        # (C, 1)
    sq_sum = jnp.sum(xf * xf, axis=0, keepdims=True)           # (1, T)
    # eps is added AFTER the sqrt (matches the PyTorch reference exactly).
    # approx=False keeps full f32 accuracy (1e-5 tolerance in the ref check).
    inv = pl.reciprocal(jnp.sqrt(sq_sum) + eps, approx=False)  # (1, T)
    o_ref[...] = (wf * xf * inv).astype(o_ref.dtype)


def _tile_and_vmem_limit(hw, c, dtype_bytes):
    """Byte-budgeted lane tile and a matching scoped-VMEM limit.

    The pipelined footprint is roughly 4 blocks (2 input bufs + 2 output bufs)
    plus the tiny resident weight, so we size one block at <= vmem_limit / 6.
    """
    try:
        vmem_cap = pltpu.get_tpu_info().vmem_capacity_bytes
    except Exception:  # no hardware query available -> assume the smallest (v7x per-TC)
        vmem_cap = 64 * 1024 * 1024
    # Safe on all generations: <= half of physical VMEM, never above 48 MiB
    # (v7x guidance), never below the 16 MiB v5e scoped default.
    vmem_limit = int(max(16 * 1024 * 1024, min(vmem_cap // 2, 48 * 1024 * 1024)))

    if hw <= 128:
        # Full-extent last dim is always a legal block shape.
        return int(hw), vmem_limit

    max_block_bytes = max(512 * 1024, min(6 * 1024 * 1024, vmem_limit // 6))
    t = (max_block_bytes // (c * dtype_bytes)) // 128 * 128
    t = max(128, int(t))
    # No point exceeding the (128-rounded-up) spatial extent.
    t = min(t, pl.cdiv(hw, 128) * 128)
    return int(t), vmem_limit


def l2norm(x, weight, eps=1e-10):
    """x: (N, C, H, W) array, weight: (C,) array. Returns same shape/dtype as x."""
    N, C, H, W = x.shape
    HW = H * W
    x2 = x.reshape(N, C, HW)                    # contiguous -> free reshape
    w2 = weight.reshape(C, 1)

    t_hw, vmem_limit = _tile_and_vmem_limit(HW, C, x.dtype.itemsize)
    n_spatial_tiles = pl.cdiv(HW, t_hw)

    kernel = functools.partial(_l2norm_kernel, eps=eps)

    cost = pl.CostEstimate(
        flops=4 * N * C * HW,                       # square, reduce-add, 2 muls
        transcendentals=2 * N * HW,                 # sqrt + reciprocal per column
        bytes_accessed=2 * N * C * HW * x.dtype.itemsize + C * weight.dtype.itemsize,
    )

    out = pl.pallas_call(
        kernel,
        out_shape=jax.ShapeDtypeStruct((N, C, HW), x.dtype),
        grid_spec=pltpu.PrefetchScalarGridSpec(
            num_scalar_prefetch=0,
            grid=(N, n_spatial_tiles),
            in_specs=[
                # Weight: same block every step -> stays resident in VMEM.
                pl.BlockSpec((C, 1), lambda n, s: (0, 0)),
                # x: one (batch, spatial-tile) block per grid point; batch dim
                # squeezed so the kernel sees a 2-D (C, t_hw) tile.
                pl.BlockSpec((None, C, t_hw), lambda n, s: (n, 0, s)),
            ],
            out_specs=pl.BlockSpec((None, C, t_hw), lambda n, s: (n, 0, s)),
        ),
        compiler_params=pltpu.CompilerParams(
            # Reduction is over channels, which stay whole inside each block,
            # so both grid axes are independent -> shard across TCs on v7x.
            dimension_semantics=("parallel", "parallel"),
            vmem_limit_bytes=vmem_limit,
        ),
        cost_estimate=cost,
    )(w2, x2)

    return out.reshape(N, C, H, W)


if __name__ == "__main__":
    # Small shapes consistent with the module: batch=2, channels=4, spatial=16x16.
    N, C, H, W = 2, 4, 16, 16
    key = jax.random.PRNGKey(0)
    kx, kw = jax.random.split(key)
    x = jax.random.normal(kx, (N, C, H, W), dtype=jnp.float32)
    # The module usually constant-inits weight to `scale` (=20); add a small
    # deterministic perturbation so per-channel scaling is actually exercised.
    weight = 20.0 + 0.1 * jax.random.normal(kw, (C,), dtype=jnp.float32)

    out = l2norm(x, weight, eps=1e-10)
    out = jax.block_until_ready(out)

    # Reference check in plain JAX (same math as the PyTorch forward).
    xf = x.astype(jnp.float32)
    nrm = jnp.sqrt(jnp.sum(xf * xf, axis=1, keepdims=True)) + 1e-10
    ref = (weight[None, :, None, None] * xf / nrm).astype(x.dtype)
    assert jnp.allclose(out, ref, atol=1e-5, rtol=1e-5), "mismatch vs reference"

    print("KERNEL_OK")
</pallas_src>

<mosaic_0001>
module attributes {stable_mosaic.version = 11 : i64} {
  func.func @_l2norm_kernel(%arg0: i32, %arg1: i32, %arg2: memref<4x1xf32, #tpu.memory_space<vmem>>, %arg3: memref<1x4x256xf32, #tpu.memory_space<vmem>>, %arg4: memref<1x4x256xf32, #tpu.memory_space<vmem>>) attributes {dimension_semantics = [#tpu.dimension_semantics<parallel>, #tpu.dimension_semantics<parallel>], iteration_bounds = array<i64: 2, 1>, scalar_prefetch = 0 : i64, scratch_operands = 0 : i64, tpu.core_type = #tpu.core_type<tc>, window_params = [{pipeline_mode = #tpu.pipeline_mode<synchronous>, transform_indices = @transform_0, window_bounds = array<i64: 4, 1>}, {transform_indices = @transform_1, window_bounds = array<i64: 1, 4, 256>}, {transform_indices = @transform_2, window_bounds = array<i64: 1, 4, 256>}]} {
    %c0 = arith.constant 0 : index
    %c0_0 = arith.constant 0 : index
    %c0_1 = arith.constant 0 : index
    %0 = vector.load %arg3[%c0, %c0_0, %c0_1] : memref<1x4x256xf32, #tpu.memory_space<vmem>>, vector<1x4x256xf32>
    %1 = vector.shape_cast %0 : vector<1x4x256xf32> to vector<4x256xf32>
    %c0_2 = arith.constant 0 : index
    %c0_3 = arith.constant 0 : index
    %2 = vector.load %arg2[%c0_2, %c0_3] : memref<4x1xf32, #tpu.memory_space<vmem>>, vector<4x1xf32>
    %3 = arith.mulf %1, %1 : vector<4x256xf32>
    %cst = arith.constant dense<0.000000e+00> : vector<256xf32>
    %4 = vector.multi_reduction <add>, %3, %cst [0] : vector<4x256xf32> to vector<256xf32>
    %5 = vector.shape_cast %4 : vector<256xf32> to vector<1x256xf32>
    %6 = math.sqrt %5 : vector<1x256xf32>
    %cst_4 = arith.constant 1.000000e-10 : f32
    %7 = vector.broadcast %cst_4 : f32 to vector<1x256xf32>
    %8 = arith.addf %6, %7 : vector<1x256xf32>
    %9 = tpu.reciprocal %8 : vector<1x256xf32> -> vector<1x256xf32>
    %10 = vector.broadcast %2 : vector<4x1xf32> to vector<4x256xf32>
    %11 = arith.mulf %10, %1 : vector<4x256xf32>
    %12 = vector.broadcast %9 : vector<1x256xf32> to vector<4x256xf32>
    %13 = arith.mulf %11, %12 : vector<4x256xf32>
    %c0_5 = arith.constant 0 : index
    %c0_6 = arith.constant 0 : index
    %c0_7 = arith.constant 0 : index
    %14 = vector.load %arg4[%c0_5, %c0_6, %c0_7] : memref<1x4x256xf32, #tpu.memory_space<vmem>>, vector<1x4x256xf32>
    %15 = vector.shape_cast %14 : vector<1x4x256xf32> to vector<4x256xf32>
    %16 = vector.shape_cast %13 : vector<4x256xf32> to vector<1x4x256xf32>
    tpu.vector_store %arg4[%c0_5, %c0_6, %c0_7], %16 {strides = array<i32>} : memref<1x4x256xf32, #tpu.memory_space<vmem>>, vector<1x4x256xf32>,
    return
  }
  func.func @transform_0(%arg0: i32, %arg1: i32) -> (i32, i32) {
    %c0_i32 = arith.constant 0 : i32
    %c0_i32_0 = arith.constant 0 : i32
    %c0_i32_1 = arith.constant 0 : i32
    return %c0_i32, %c0_i32_0 : i32, i32
  }
  func.func @transform_1(%arg0: i32, %arg1: i32) -> (i32, i32, i32) {
    %c0_i32 = arith.constant 0 : i32
    %c0_i32_0 = arith.constant 0 : i32
    return %arg0, %c0_i32, %arg1 : i32, i32, i32
  }
  func.func @transform_2(%arg0: i32, %arg1: i32) -> (i32, i32, i32) {
    %c0_i32 = arith.constant 0 : i32
    %c0_i32_0 = arith.constant 0 : i32
    return %arg0, %c0_i32, %arg1 : i32, i32, i32
  }
}

</mosaic_0001>

<llo_original>
// kernel: tpu_custom_call.1
$region0: #{tpu_custom_call.1}
  #allocation0 [shape = 'u32[]', space=smem, size = 0x4, offset = 0x4, fixed_abs, tag = 'smem constant byte address 0x4 - core index']
  #allocation1 [shape = 'u32[72,128]{1,0:T(1,128)}', space=vmem, size = 0x9000, scoped, tag = 'internal scratch']
  %s0 = inlined_call_operand.vmem [shape: f32[4,1], index: 0, kind: input, shape index: {}]
  %s1 = inlined_call_operand.hbm [shape: f32[2,4,256], index: 1, kind: input, shape index: {}]
  %s2 = inlined_call_operand.hbm [shape: f32[2,4,256], index: 2, kind: output, shape index: {}]
  %s3 = sld [smem:[#allocation0]]
  $region45: #{tpu_custom_call.1} parent=0
    _
  %s5 = ssub.s32 1, %s3
  %s6 = scalar_select 0, %s5, %s3
  $region1: #{tpu_custom_call.1} parent=0
    #allocation2 [shape = 'u8[8192]{0}', space=vmem, size = 0x2000, scoped, tag = 'input window, operand 1']
    #allocation3 [shape = 's32[2]{0}', space=sflag, size = 0x8, scoped, tag = 'scoped memory for tpu_custom_call.1']
    #allocation4 [shape = 's32[2]{0}', space=sflag, size = 0x8, scoped, tag = 'scoped memory for tpu_custom_call.1']
    #allocation5 [shape = 'u8[8192]{0}', space=vmem, size = 0x2000, scoped, tag = 'output window, operand 0']
    %7 = vsyncpa [#allocation3], 0
    %s8 = scalar_lea.sflag [#allocation3], 1
    %9 = vsyncpa %s8, 0
    %10 = vsyncpa [#allocation4], 0
    %s11 = scalar_lea.sflag [#allocation4], 1
    %12 = vsyncpa %s11, 0
    loop: start=0, step=1, limit=4
    $region2: #{tpu_custom_call.1} parent=1 // loop_pre_header
      _
    $region3: #{tpu_custom_call.1} parent=1 // loop_header
      %s14 = sphi 0, %s18
      %p15 = scmp.ge.s32.totalorder %s14, 4
      %s21 = sphi 0, %s33
      %s22 = sphi 0, %s29
      %s23 = sphi 0, %s21
      %s24 = sphi 0, %s22
      %s25 = sphi 0, %s23
      %s26 = sphi 0, %s24
      %s34 = sphi 0, %s34
      %s36 = sphi 0, %s34
      %s37 = sphi 0, %s36
      %s51 = sphi 0, %s37
      %s59 = sphi 0, %s61
      %s62 = sphi 0, %s59
      %s63 = sphi 0, %s62
      %s79 = sphi 0, %s63
      %s87 = sphi 0, %s89
      %s90 = sphi 0, %s87
      %s91 = sphi 0, %s90
      %s107 = sphi 0, %s91
    $region4: #{tpu_custom_call.1} parent=1 // loop_header_branch
      %17 = sbr.rel (%p15) target = $region8
    $region5: #{tpu_custom_call.1} parent=1 // loop_body
      %s19 = ssub.s32 %s14, 1
      %s20 = ssub.s32 %s14, 2
      %s27 = sadd.s32 1, %s22
      %p28 = scmp.ge.s32.totalorder %s27, 1
      %s29 = scalar_select %p28, 0, %s27
      %s30 = sadd.s32 1, %s21
      %s31 = scalar_select %p28, %s30, %s21
      %p32 = scmp.ge.s32.totalorder %s31, 2
      %s33 = scalar_select %p32, 0, %s31
      %s35 = sadd.s32 %s34, 1
      %p38 = scmp.eq.s32.totalorder %s14, 1
      %p39 = scmp.ne.s32.totalorder %s34, %s36
      %p40 = scmp.eq.s32.totalorder %s14, 0
      %p41 = por %p39, %p40
      %p42 = scmp.ne.s32.totalorder %s34, %s36
      %p43 = scmp.eq.s32.totalorder %s19, 1
      %p44 = por %p42, %p43
      %p45 = scmp.ne.s32.totalorder %s36, %s37
      %p46 = scmp.eq.s32.totalorder %s19, 0
      %p47 = por %p45, %p46
      %p48 = scmp.ne.s32.totalorder %s36, %s37
      %p49 = scmp.eq.s32.totalorder %s20, 1
      %p50 = por %p48, %p49
      %p52 = scmp.ne.s32.totalorder %s37, %s51
      %p53 = scmp.eq.s32.totalorder %s20, 0
      %p54 = por %p52, %p53
      %s55 = ssub.s32 %s21, %s33
      %s56 = ssub.s32 %s22, %s29
      %s57 = sor.u32 %s55, %s56
      %p58 = scmp.eq.s32.totalorder %s57, 0
      %s60 = sadd.s32 %s59, 1
      %s61 = scalar_select %p58, %s59, %s60
      %p64 = pneg %p58
      %p65 = scmp.eq.s32.totalorder %s14, 1
      %p66 = por %p64, %p65
      %p67 = scmp.ne.s32.totalorder %s59, %s62
      %p68 = scmp.eq.s32.totalorder %s14, 0
      %p69 = por %p67, %p68
      %p70 = scmp.ne.s32.totalorder %s59, %s62
      %p71 = scmp.eq.s32.totalorder %s19, 1
      %p72 = por %p70, %p71
      %p73 = scmp.ne.s32.totalorder %s62, %s63
      %p74 = scmp.eq.s32.totalorder %s19, 0
      %p75 = por %p73, %p74
      %p76 = scmp.ne.s32.totalorder %s62, %s63
      %p77 = scmp.eq.s32.totalorder %s20, 1
      %p78 = por %p76, %p77
      %p80 = scmp.ne.s32.totalorder %s63, %s79
      %p81 = scmp.eq.s32.totalorder %s20, 0
      %p82 = por %p80, %p81
      %s83 = ssub.s32 %s21, %s33
      %s84 = ssub.s32 %s22, %s29
      %s85 = sor.u32 %s83, %s84
      %p86 = scmp.eq.s32.totalorder %s85, 0
      %s88 = sadd.s32 %s87, 1
      %s89 = scalar_select %p86, %s87, %s88
      %p92 = pneg %p86
      %p93 = scmp.eq.s32.totalorder %s14, 1
      %p94 = por %p92, %p93
      %p95 = scmp.ne.s32.totalorder %s87, %s90
      %p96 = scmp.eq.s32.totalorder %s14, 0
      %p97 = por %p95, %p96
      %p98 = scmp.ne.s32.totalorder %s87, %s90
      %p99 = scmp.eq.s32.totalorder %s19, 1
      %p100 = por %p98, %p99
      %p101 = scmp.ne.s32.totalorder %s90, %s91
      %p102 = scmp.eq.s32.totalorder %s19, 0
      %p103 = por %p101, %p102
      %p104 = scmp.ne.s32.totalorder %s90, %s91
      %p105 = scmp.eq.s32.totalorder %s20, 1
      %p106 = por %p104, %p105
      %p108 = scmp.ne.s32.totalorder %s91, %s107
      %p109 = scmp.eq.s32.totalorder %s20, 0
      %p110 = por %p108, %p109
      %p111 = scmp.le.s32.totalorder 1, %s14
      %p112 = scmp.lt.s32.totalorder %s14, 3
      %p113 = pnand %p111, %p112
      %p114 = pneg %p113
      // Predicated region
      $region9: #{tpu_custom_call.1} parent=5 // pred_check
        _
      $region10: #{tpu_custom_call.1} parent=5 // pred_check_branch
        %116 = sbr.rel (%p113) target = $region12
      $region11: #{tpu_custom_call.1} parent=5 // pred_region
        %s117 = ssub.s32 %s14, 1
        // Predicated region
        $region13: #{tpu_custom_call.1} parent=11 // pred_check
          %p118 = pneg %p47
        $region14: #{tpu_custom_call.1} parent=11 // pred_check_branch
          %120 = sbr.rel (%p118) target = $region16
        $region15: #{tpu_custom_call.1} parent=11 // pred_region
          _
        $region16: #{tpu_custom_call.1} parent=11 // pred_fallthru
          _
      $region12: #{tpu_custom_call.1} parent=5 // pred_fallthru
        _
      %p121 = scmp.lt.s32.totalorder %s14, 2
      // Predicated region
      $region17: #{tpu_custom_call.1} parent=5 // pred_check
        %p122 = pneg %p121
      $region18: #{tpu_custom_call.1} parent=5 // pred_check_branch
        %124 = sbr.rel (%p122) target = $region20
      $region19: #{tpu_custom_call.1} parent=5 // pred_region
        // Predicated region
        $region21: #{tpu_custom_call.1} parent=19 // pred_check
          %p125 = pneg %p69
        $region22: #{tpu_custom_call.1} parent=19 // pred_check_branch
          %127 = sbr.rel (%p125) target = $region24
        $region23: #{tpu_custom_call.1} parent=19 // pred_region
          %s128 = sand.u32 %s59, 1
          %s129 = scalar_lea.sflag [#allocation3], %s128
          %s130 = sand.u32 %s59, 1
          %s131 = smul.addr %s130, 8
          %s132 = scalar_lea.vmem [#allocation2], %s131
          %s133 = smul.u32 2, %s22
          %135 = vsyncadd %s129, 0
          %s136 = smul.addr %s21, 2
          %s137 = sadd.s32 %s133, %s136
          %s138 = smul.addr %s137, 4
          %s139 = scalar_lea.hbm %s1, %s138
          %s141 = sshll.u32 %s139, 4
          %s142 = int_to_ptr.hbm [resolvable:$true] %s141
          %s143 = sshll.u32 %s132, 4
          %s144 = int_to_ptr.vmem [resolvable:$true] %s143
          %146 = dma.hbm_to_vmem [thread:$0]  %s142, 128, %s144, %s129
        $region24: #{tpu_custom_call.1} parent=19 // pred_fallthru
          _
      $region20: #{tpu_custom_call.1} parent=5 // pred_fallthru
        _
      %p147 = scmp.le.s32.totalorder 1, %s14
      %p148 = scmp.lt.s32.totalorder %s14, 3
      %p149 = pnand %p147, %p148
      %p150 = pneg %p149
      // Predicated region
      $region25: #{tpu_custom_call.1} parent=5 // pred_check
        _
      $region26: #{tpu_custom_call.1} parent=5 // pred_check_branch
        %152 = sbr.rel (%p149) target = $region28
      $region27: #{tpu_custom_call.1} parent=5 // pred_region
        %s153 = ssub.s32 %s14, 1
        %s154 = sand.u32 %s62, 1
        %s155 = scalar_lea.sflag [#allocation3], %s154
        %s156 = sand.u32 %s62, 1
        %s157 = smul.addr %s156, 8
        %s158 = scalar_lea.vmem [#allocation2], %s157
        // Predicated region
        $region29: #{tpu_custom_call.1} parent=27 // pred_check
          %p159 = pneg %p75
        $region30: #{tpu_custom_call.1} parent=27 // pred_check_branch
          %161 = sbr.rel (%p159) target = $region32
        $region31: #{tpu_custom_call.1} parent=27 // pred_region
          %163 = dma.done %s155, 128
        $region32: #{tpu_custom_call.1} parent=27 // pred_fallthru
          _
        %p164 = pneg %p47
        %p165 = pneg %p44
        %s166 = sand.u32 %s62, 1
        %s167 = scalar_lea.sflag [#allocation3], %s166
        %s168 = sand.u32 %s62, 1
        %s169 = smul.addr %s168, 8
        %s170 = scalar_lea.vmem [#allocation2], %s169
        %p171 = pneg %p75
        %p172 = pneg %p72
        %p173 = pneg %p103
        %p174 = pneg %p100
        %s175 = sand.u32 %s90, 1
        %s176 = scalar_lea.sflag [#allocation4], %s175
        %s177 = sand.u32 %s90, 1
        %s178 = smul.addr %s177, 8
        %s179 = scalar_lea.vmem [#allocation5], %s178
        %s180 = smul.u32 2, %s24
        %s181 = smul.u32 2, %s24
        %v182 = vld [vmem:[%s158] sm:$0xff]
        %v183 = vld [vmem:[%s0] sm:$0xf]
        %v184 = vmul.f32 %v182, %v182
        %186 = vst [vmem:[#allocation1] ss:$2 sm:$0xff] %v184
        %v187 = vld.sshfl [vmem:[#allocation1] sm:$0xff pattern:$0x75316420]
        %v188 = vld.sshfl [vmem:[#allocation1 + $0x8] sm:$0xff pattern:$0x75316420]
        %vm191 = vcmask 1043456
        %v192 = vsel %vm191, %v187, 0.0
        %v193 = vrot.slane %v192, 4
        %v194 = vadd.f32 %v192, %v193
        %v195 = vrot.slane %v194, 2
        %v196 = vadd.f32 %v194, %v195
        %v197 = vrot.slane %v196, 1
        %v198 = vadd.f32 %v196, %v197
        %v199 = vsel %vm191, %v188, 0.0
        %v200 = vrot.slane %v199, 4
        %v201 = vadd.f32 %v199, %v200
        %v202 = vrot.slane %v201, 2
        %v203 = vadd.f32 %v201, %v202
        %v204 = vrot.slane %v203, 1
        %v205 = vadd.f32 %v203, %v204
        %v206 = vrsqrt.pop %v198
        %v207 = vmul.f32 %v206, %v198
        %v208 = vmul.f32 %v207, %v206
        %v209 = vmul.f32 0.5, %v208
        %v210 = vsub.f32 1.5, %v209
        %v211 = vmul.f32 %v206, %v210
        %v212 = vmul.f32 %v198, %v211
        %vm213 = vcmp.eq.f32.partialorder %v198, inf
        %v214 = vsel %vm213, %v198, %v212
        %vm215 = vcmp.eq.f32.partialorder %v198, 0.0
        %v216 = vand.u32 %v198, 2147483648
        %v217 = vsel %vm215, %v216, %v214
        %v218 = vrsqrt.pop %v205
        %v219 = vmul.f32 %v218, %v205
        %v220 = vmul.f32 %v219, %v218
        %v221 = vmul.f32 0.5, %v220
        %v222 = vsub.f32 1.5, %v221
        %v223 = vmul.f32 %v218, %v222
        %v224 = vmul.f32 %v205, %v223
        %vm225 = vcmp.eq.f32.partialorder %v205, inf
        %v226 = vsel %vm225, %v205, %v224
        %vm227 = vcmp.eq.f32.partialorder %v205, 0.0
        %v228 = vand.u32 %v205, 2147483648
        %v229 = vsel %vm227, %v228, %v226
        %v230 = vadd.f32 %v217, 1e-10
        %v231 = vadd.f32 %v229, 1e-10
        %v232 = vrcp.pop %v230
        %v233 = vmul.f32 %v230, %v232
        %v234 = vsub.f32 1.0, %v233
        %v235 = vmul.f32 %v232, %v234
        %v236 = vadd.f32 %v232, %v235
        %vm237 = vweird.f32 %v230
        %vm238 = vweird.f32 %v232
        %vm239 = vmor %vm237, %vm238
        %v240 = vsel %vm239, %v232, %v236
        %v241 = vand.u32 2147483647, %v230
        %vm242 = vcmp.eq.f32.partialorder %v241, 8.507059e+37
        %v243 = vand.u32 %v230, 2147483648
        %v244 = vor.u32 1.1754944e-38, %v243
        %v245 = vsel %vm242, %v244, %v240
        %v246 = vrcp.pop %v231
        %v247 = vmul.f32 %v231, %v246
        %v248 = vsub.f32 1.0, %v247
        %v249 = vmul.f32 %v246, %v248
        %v250 = vadd.f32 %v246, %v249
        %vm251 = vweird.f32 %v231
        %vm252 = vweird.f32 %v246
        %vm253 = vmor %vm251, %vm252
        %v254 = vsel %vm253, %v246, %v250
        %v255 = vand.u32 2147483647, %v231
        %vm256 = vcmp.eq.f32.partialorder %v255, 8.507059e+37
        %v257 = vand.u32 %v231, 2147483648
        %v258 = vor.u32 1.1754944e-38, %v257
        %v259 = vsel %vm256, %v258, %v254
        %261 = vset.pattern.permute.xlu0 0
        %262 = vperm.xlu0 %261, %v183
        %v263 = vpop.permute.xlu0 %262
        %266 = vst [vmem:[#allocation1] ss:$2 sm:$0xff] %v182
        %v267 = vld.sshfl [vmem:[#allocation1] sm:$0xff pattern:$0x75316420]
        %v268 = vld.sshfl [vmem:[#allocation1 + $0x8] sm:$0xff pattern:$0x75316420]
        %v271 = vmul.f32 %v263, %v267
        %v272 = vmul.f32 %v263, %v268
        %v273 = vmul.f32 %v271, %v245
        %v274 = vmul.f32 %v272, %v259
        %v277 = vrot.slane %v274, 4
        %v278 = vsel %vm191, %v273, %v277
        %280 = vst [vmem:[%s179] sm:$0xff] %v278
        %s281 = sand.u32 %s90, 1
        %s282 = scalar_lea.sflag [#allocation4], %s281
        %s283 = sand.u32 %s90, 1
        %s284 = smul.addr %s283, 8
        %s285 = scalar_lea.vmem [#allocation5], %s284
        // Predicated region
        $region33: #{tpu_custom_call.1} parent=27 // pred_check
          %p286 = pneg %p100
        $region34: #{tpu_custom_call.1} parent=27 // pred_check_branch
          %288 = sbr.rel (%p286) target = $region36
        $region35: #{tpu_custom_call.1} parent=27 // pred_region
          %s289 = smul.u32 2, %s24
          %291 = vsyncadd %s282, 0
          %s292 = smul.addr %s23, 2
          %s293 = sadd.s32 %s289, %s292
          %s294 = smul.addr %s293, 4
          %s295 = scalar_lea.hbm %s2, %s294
          %s297 = sshll.u32 %s285, 4
          %s298 = int_to_ptr.vmem [resolvable:$true] %s297
          %s299 = sshll.u32 %s295, 4
          %s300 = int_to_ptr.hbm [resolvable:$true] %s299
          %302 = dma.vmem_to_hbm [thread:$0]  %s298, 128, %s300, %s282
        $region36: #{tpu_custom_call.1} parent=27 // pred_fallthru
          _
      $region28: #{tpu_custom_call.1} parent=5 // pred_fallthru
        _
      %p303 = scmp.le.s32.totalorder 2, %s14
      // Predicated region
      $region37: #{tpu_custom_call.1} parent=5 // pred_check
        %p304 = pneg %p303
      $region38: #{tpu_custom_call.1} parent=5 // pred_check_branch
        %306 = sbr.rel (%p304) target = $region40
      $region39: #{tpu_custom_call.1} parent=5 // pred_region
        %s307 = ssub.s32 %s14, 2
        // Predicated region
        $region41: #{tpu_custom_call.1} parent=39 // pred_check
          %p308 = pneg %p106
        $region42: #{tpu_custom_call.1} parent=39 // pred_check_branch
          %310 = sbr.rel (%p308) target = $region44
        $region43: #{tpu_custom_call.1} parent=39 // pred_region
          %s311 = sand.u32 %s91, 1
          %s312 = scalar_lea.sflag [#allocation4], %s311
          %s313 = sand.u32 %s91, 1
          %s314 = smul.addr %s313, 8
          %s315 = scalar_lea.vmem [#allocation5], %s314
          %317 = dma.done %s312, 128
        $region44: #{tpu_custom_call.1} parent=39 // pred_fallthru
          _
      $region40: #{tpu_custom_call.1} parent=5 // pred_fallthru
        _
    $region6: #{tpu_custom_call.1} parent=1 // loop_footer
      %s18 = sadd.s32 1, %s14
    $region7: #{tpu_custom_call.1} parent=1 // loop_footer_branch
      %13 = sbr.rel target = $region3
    $region8: #{tpu_custom_call.1} parent=1 // loop_exit
      _
    %318 = vsyncpa [#allocation3], 1
    %s319 = scalar_lea.sflag [#allocation3], 1
    %320 = vsyncpa %s319, 1
    %321 = vsyncpa [#allocation4], 1
    %s322 = scalar_lea.sflag [#allocation4], 1
    %323 = vsyncpa %s322, 1

</llo_original>
